<compile_context>
chip_gen: v6e
topology: v6e:2x2x1
jax: 0.10.0
libtpu: 0.0.40
codegen_flags: <defaults>
</compile_context>

<pallas_src>
import functools

import jax
import jax.numpy as jnp
from jax.experimental import pallas as pl
from jax.experimental.pallas import tpu as pltpu


def _round_up(x, m):
    return (x + m - 1) // m * m


def _choose_block_rows(n, c, itemsize):
    """Pick a batch tile so one buffered (TN, C) logits tile is ~1-2 MiB."""
    gran = 8 if itemsize >= 4 else 16          # sublane granularity (f32 / bf16)
    per_buffer_budget = 2 * 1024 * 1024        # bytes per pipelining buffer
    tn = per_buffer_budget // max(1, c * itemsize)
    tn = max(gran, min(tn, 16384))             # keep f32 temporaries bounded too
    tn = (tn // gran) * gran
    tn = min(tn, _round_up(n, gran))           # do not over-tile tiny batches
    return max(gran, tn)


def _focal_loss_kernel(n_ref, logits_ref, targets_ref, out_ref, *,
                       alpha, gamma, block_rows, reduce):
    i = pl.program_id(0)
    n_valid = n_ref[0]                                  # scalar-prefetch (SMEM)

    logits = logits_ref[...].astype(jnp.float32)        # (TN, C), f32 in-register
    tgt = targets_ref[...]                              # (TN, 1) int32
    tn, c = logits.shape

    # One-hot select of the target logit (no dynamic lane gather on TPU).
    col_ids = jax.lax.broadcasted_iota(jnp.int32, (tn, c), dimension=1)
    onehot = (col_ids == tgt).astype(jnp.float32)       # (TN, C)

    # Numerically stable CE in the max-shifted domain; row_max cancels between
    # the logsumexp and the gathered target logit.
    row_max = jnp.max(logits, axis=-1, keepdims=True)           # (TN, 1)
    shifted = logits - row_max
    exp_shifted = jnp.exp(shifted)                              # (TN, C), EUP
    sum_exp = jnp.sum(exp_shifted, axis=-1, keepdims=True)      # (TN, 1)
    tgt_shifted = jnp.sum(shifted * onehot, axis=-1, keepdims=True)
    tgt_exp = jnp.sum(exp_shifted * onehot, axis=-1, keepdims=True)

    ce = jnp.log(sum_exp) - tgt_shifted                         # (TN, 1)
    pt = tgt_exp / sum_exp                 # == exp(-ce); reuses exp_shifted

    # Clamp FP rounding noise (pt can round slightly above 1). Deliberate,
    # documented deviation from a literal (1 - pt)**gamma; requires gamma >= 0.
    one_minus_pt = jnp.maximum(1.0 - pt, 0.0)
    if gamma == 2.0:
        mod = one_minus_pt * one_minus_pt  # default gamma: 1 VPU mul, no pow
    elif gamma == 1.0:
        mod = one_minus_pt
    elif gamma == 0.0:
        mod = jnp.ones_like(one_minus_pt)
    else:
        mod = one_minus_pt ** gamma
    focal = alpha * mod * ce                                    # (TN, 1)

    # Select-out rows past the true batch size (garbage in boundary blocks may
    # be NaN/Inf; a select — not a multiply — guarantees exact zeros).
    row_ids = i * block_rows + jax.lax.broadcasted_iota(jnp.int32, (tn, 1), 0)
    focal = jnp.where(row_ids < n_valid, focal, 0.0)

    if reduce:
        # One masked partial sum per block, written into a lane-aligned (8,128)
        # tile: value at [0, 0], zeros elsewhere. Keeps the grid axis parallel.
        block_sum = jnp.sum(focal, axis=0, keepdims=True)       # (1, 1)
        sub = jax.lax.broadcasted_iota(jnp.int32, (8, 128), 0)
        lane = jax.lax.broadcasted_iota(jnp.int32, (8, 128), 1)
        out_ref[...] = jnp.where((sub == 0) & (lane == 0), block_sum, 0.0)
    else:
        out_ref[...] = focal


def focal_loss(logits, targets, *, alpha=1.0, gamma=2.0, reduce=True,
               block_rows=None):
    """Focal loss. logits: (N, C) float (f32 or bf16); targets: (N,) int."""
    n, c = logits.shape
    itemsize = jnp.dtype(logits.dtype).itemsize
    gran = 8 if itemsize >= 4 else 16

    if block_rows is None:
        block_rows = _choose_block_rows(n, c, itemsize)
    block_rows = max(gran, _round_up(block_rows, gran))

    num_blocks = pl.cdiv(n, block_rows)

    targets2d = targets.astype(jnp.int32).reshape(n, 1)
    n_arr = jnp.array([n], dtype=jnp.int32)            # scalar-prefetch arg

    kernel = functools.partial(
        _focal_loss_kernel,
        alpha=float(alpha), gamma=float(gamma),
        block_rows=block_rows, reduce=bool(reduce))

    if reduce:
        # One (8,128) lane-aligned tile of partial sums per block.
        out_shape = jax.ShapeDtypeStruct((num_blocks * 8, 128), jnp.float32)
        out_spec = pl.BlockSpec((8, 128), lambda i, n_ref: (i, 0))
        out_bytes = num_blocks * 8 * 128 * 4
    else:
        out_shape = jax.ShapeDtypeStruct((n, 1), jnp.float32)
        out_spec = pl.BlockSpec((block_rows, 1), lambda i, n_ref: (i, 0))
        out_bytes = n * 4

    cost = pl.CostEstimate(
        flops=8 * n * c,
        transcendentals=n * c + n,          # exp over the tile + log per row
        bytes_accessed=n * c * itemsize + n * 4 + out_bytes)

    out = pl.pallas_call(
        kernel,
        out_shape=out_shape,
        grid_spec=pltpu.PrefetchScalarGridSpec(
            num_scalar_prefetch=1,
            grid=(num_blocks,),
            in_specs=[
                pl.BlockSpec((block_rows, c), lambda i, n_ref: (i, 0)),
                pl.BlockSpec((block_rows, 1), lambda i, n_ref: (i, 0)),
            ],
            out_specs=out_spec,
        ),
        compiler_params=pltpu.CompilerParams(
            dimension_semantics=("parallel",),   # independent blocks -> megacore
            vmem_limit_bytes=32 * 1024 * 1024,   # safe on v5e/v6e/v7x
        ),
        cost_estimate=cost,
    )(n_arr, logits, targets2d)

    if reduce:
        # Tiny num_blocks-scale reduction; non-[0,0] tile entries are zero.
        return jnp.sum(out) / n
    return out[:, 0]


def _focal_loss_ref(logits, targets, alpha=1.0, gamma=2.0, reduce=True):
    logits = logits.astype(jnp.float32)
    lse = jax.scipy.special.logsumexp(logits, axis=-1)
    tgt_logit = jnp.take_along_axis(logits, targets[:, None].astype(jnp.int32),
                                    axis=-1)[:, 0]
    ce = lse - tgt_logit
    pt = jnp.exp(-ce)
    fl = alpha * (1.0 - pt) ** gamma * ce
    return jnp.mean(fl) if reduce else fl


if __name__ == "__main__":
    key = jax.random.PRNGKey(0)
    k1, k2, k3, k4, k5, k6 = jax.random.split(key, 6)

    # Case 1: small batch, single block, reduce=True (matches the PyTorch demo).
    N1, C1 = 8, 32
    logits1 = jax.random.normal(k1, (N1, C1), dtype=jnp.float32)
    targets1 = jax.random.randint(k2, (N1,), 0, C1, dtype=jnp.int32)
    out1 = jax.block_until_ready(focal_loss(logits1, targets1,
                                            alpha=1.0, gamma=2.0, reduce=True))
    ref1 = _focal_loss_ref(logits1, targets1, alpha=1.0, gamma=2.0, reduce=True)
    assert jnp.allclose(out1, ref1, rtol=1e-5, atol=1e-5), (out1, ref1)

    # Case 2: batch not a multiple of the tile -> multi-block grid + boundary
    # padding mask (no jnp.pad of the logits), both reduce=False and reduce=True.
    N2, C2 = 50, 32
    logits2 = jax.random.normal(k3, (N2, C2), dtype=jnp.float32)
    targets2 = jax.random.randint(k4, (N2,), 0, C2, dtype=jnp.int32)
    out2 = jax.block_until_ready(focal_loss(logits2, targets2, alpha=0.25,
                                            gamma=2.0, reduce=False,
                                            block_rows=16))
    ref2 = _focal_loss_ref(logits2, targets2, alpha=0.25, gamma=2.0, reduce=False)
    assert jnp.allclose(out2, ref2, rtol=1e-5, atol=1e-5)
    out2m = jax.block_until_ready(focal_loss(logits2, targets2, alpha=0.25,
                                             gamma=2.0, reduce=True,
                                             block_rows=16))
    ref2m = _focal_loss_ref(logits2, targets2, alpha=0.25, gamma=2.0, reduce=True)
    assert jnp.allclose(out2m, ref2m, rtol=1e-5, atol=1e-5), (out2m, ref2m)

    # Case 3: bf16 logits stay bf16 through the DMA (halved HBM read traffic);
    # f32 math happens in-register inside the kernel.
    N3, C3 = 40, 32
    logits3 = jax.random.normal(k5, (N3, C3), dtype=jnp.bfloat16)
    targets3 = jax.random.randint(k6, (N3,), 0, C3, dtype=jnp.int32)
    out3 = jax.block_until_ready(focal_loss(logits3, targets3,
                                            alpha=1.0, gamma=2.0, reduce=True))
    ref3 = _focal_loss_ref(logits3, targets3, alpha=1.0, gamma=2.0, reduce=True)
    assert jnp.allclose(out3, ref3, rtol=1e-5, atol=1e-5), (out3, ref3)

    print("KERNEL_OK")
</pallas_src>

<mosaic_0001>
module attributes {stable_mosaic.version = 11 : i64} {
  func.func @_focal_loss_kernel(%arg0: i32, %arg1: memref<1xi32, #tpu.memory_space<smem>>, %arg2: memref<8x32xf32, #tpu.memory_space<vmem>>, %arg3: memref<8x1xi32, #tpu.memory_space<vmem>>, %arg4: memref<8x128xf32, #tpu.memory_space<vmem>>) attributes {dimension_semantics = [#tpu.dimension_semantics<parallel>], iteration_bounds = array<i64: 1>, scalar_prefetch = 1 : i64, scratch_operands = 0 : i64, tpu.core_type = #tpu.core_type<tc>, window_params = [{transform_indices = @transform_0, window_bounds = array<i64: 8, 32>}, {transform_indices = @transform_1, window_bounds = array<i64: 8, 1>}, {transform_indices = @transform_2, window_bounds = array<i64: 8, 128>}]} {
    %c0 = arith.constant 0 : index
    %0 = memref.load %arg1[%c0] : memref<1xi32, #tpu.memory_space<smem>>
    %c0_0 = arith.constant 0 : index
    %c0_1 = arith.constant 0 : index
    %1 = vector.load %arg2[%c0_0, %c0_1] : memref<8x32xf32, #tpu.memory_space<vmem>>, vector<8x32xf32>
    %c0_2 = arith.constant 0 : index
    %c0_3 = arith.constant 0 : index
    %2 = vector.load %arg3[%c0_2, %c0_3] : memref<8x1xi32, #tpu.memory_space<vmem>>, vector<8x1xi32>
    %3 = tpu.iota {dimensions = array<i32: 1>} : vector<8x32xi32>
    %4 = vector.broadcast %2 : vector<8x1xi32> to vector<8x32xi32>
    %5 = arith.cmpi eq, %3, %4 : vector<8x32xi32>
    %6 = arith.extui %5 : vector<8x32xi1> to vector<8x32xi32>
    %7 = arith.sitofp %6 : vector<8x32xi32> to vector<8x32xf32>
    %cst = arith.constant dense<0xFF800000> : vector<8xf32>
    %8 = vector.multi_reduction <maximumf>, %1, %cst [1] : vector<8x32xf32> to vector<8xf32>
    %9 = vector.shape_cast %8 : vector<8xf32> to vector<8x1xf32>
    %10 = vector.broadcast %9 : vector<8x1xf32> to vector<8x32xf32>
    %11 = arith.subf %1, %10 : vector<8x32xf32>
    %12 = math.exp %11 : vector<8x32xf32>
    %cst_4 = arith.constant dense<0.000000e+00> : vector<8xf32>
    %13 = vector.multi_reduction <add>, %12, %cst_4 [1] : vector<8x32xf32> to vector<8xf32>
    %14 = vector.shape_cast %13 : vector<8xf32> to vector<8x1xf32>
    %15 = arith.mulf %11, %7 : vector<8x32xf32>
    %cst_5 = arith.constant dense<0.000000e+00> : vector<8xf32>
    %16 = vector.multi_reduction <add>, %15, %cst_5 [1] : vector<8x32xf32> to vector<8xf32>
    %17 = vector.shape_cast %16 : vector<8xf32> to vector<8x1xf32>
    %18 = arith.mulf %12, %7 : vector<8x32xf32>
    %cst_6 = arith.constant dense<0.000000e+00> : vector<8xf32>
    %19 = vector.multi_reduction <add>, %18, %cst_6 [1] : vector<8x32xf32> to vector<8xf32>
    %20 = vector.shape_cast %19 : vector<8xf32> to vector<8x1xf32>
    %21 = math.log %14 : vector<8x1xf32>
    %22 = arith.subf %21, %17 : vector<8x1xf32>
    %23 = arith.divf %20, %14 : vector<8x1xf32>
    %cst_7 = arith.constant 1.000000e+00 : f32
    %24 = vector.broadcast %cst_7 : f32 to vector<8x1xf32>
    %25 = arith.subf %24, %23 : vector<8x1xf32>
    %cst_8 = arith.constant 0.000000e+00 : f32
    %26 = vector.broadcast %cst_8 : f32 to vector<8x1xf32>
    %27 = arith.maximumf %25, %26 : vector<8x1xf32>
    %28 = arith.mulf %27, %27 : vector<8x1xf32>
    %cst_9 = arith.constant 1.000000e+00 : f32
    %29 = vector.broadcast %cst_9 : f32 to vector<8x1xf32>
    %30 = arith.mulf %29, %28 : vector<8x1xf32>
    %31 = arith.mulf %30, %22 : vector<8x1xf32>
    %c8_i32 = arith.constant 8 : i32
    %32 = arith.muli %arg0, %c8_i32 : i32
    %33 = tpu.iota {dimensions = array<i32: 0>} : vector<8x1xi32>
    %34 = vector.broadcast %32 : i32 to vector<8x1xi32>
    %35 = arith.addi %34, %33 : vector<8x1xi32>
    %36 = vector.broadcast %0 : i32 to vector<8x1xi32>
    %37 = arith.cmpi slt, %35, %36 : vector<8x1xi32>
    %cst_10 = arith.constant 0.000000e+00 : f32
    %38 = vector.broadcast %cst_10 : f32 to vector<8x1xf32>
    %39 = arith.select %37, %31, %38 : vector<8x1xi1>, vector<8x1xf32>
    %cst_11 = arith.constant dense<0.000000e+00> : vector<1xf32>
    %40 = vector.multi_reduction <add>, %39, %cst_11 [0] : vector<8x1xf32> to vector<1xf32>
    %41 = vector.shape_cast %40 : vector<1xf32> to vector<1x1xf32>
    %42 = tpu.iota {dimensions = array<i32: 0>} : vector<8x128xi32>
    %43 = tpu.iota {dimensions = array<i32: 1>} : vector<8x128xi32>
    %c0_i32 = arith.constant 0 : i32
    %44 = vector.broadcast %c0_i32 : i32 to vector<8x128xi32>
    %45 = arith.cmpi eq, %42, %44 : vector<8x128xi32>
    %c0_i32_12 = arith.constant 0 : i32
    %46 = vector.broadcast %c0_i32_12 : i32 to vector<8x128xi32>
    %47 = arith.cmpi eq, %43, %46 : vector<8x128xi32>
    %48 = arith.andi %45, %47 : vector<8x128xi1>
    %cst_13 = arith.constant 0.000000e+00 : f32
    %49 = vector.shape_cast %41 : vector<1x1xf32> to vector<1x1xf32>
    %50 = vector.broadcast %49 : vector<1x1xf32> to vector<8x128xf32>
    %51 = vector.broadcast %cst_13 : f32 to vector<8x128xf32>
    %52 = arith.select %48, %50, %51 : vector<8x128xi1>, vector<8x128xf32>
    %c0_14 = arith.constant 0 : index
    %c0_15 = arith.constant 0 : index
    %53 = vector.load %arg4[%c0_14, %c0_15] : memref<8x128xf32, #tpu.memory_space<vmem>>, vector<8x128xf32>
    tpu.vector_store %arg4[%c0_14, %c0_15], %52 {strides = array<i32>} : memref<8x128xf32, #tpu.memory_space<vmem>>, vector<8x128xf32>,
    return
  }
  func.func @transform_0(%arg0: i32, %arg1: memref<1xi32, #tpu.memory_space<smem>>) -> (i32, i32) {
    %c0_i32 = arith.constant 0 : i32
    %c0_i32_0 = arith.constant 0 : i32
    return %arg0, %c0_i32 : i32, i32
  }
  func.func @transform_1(%arg0: i32, %arg1: memref<1xi32, #tpu.memory_space<smem>>) -> (i32, i32) {
    %c0_i32 = arith.constant 0 : i32
    %c0_i32_0 = arith.constant 0 : i32
    return %arg0, %c0_i32 : i32, i32
  }
  func.func @transform_2(%arg0: i32, %arg1: memref<1xi32, #tpu.memory_space<smem>>) -> (i32, i32) {
    %c0_i32 = arith.constant 0 : i32
    %c0_i32_0 = arith.constant 0 : i32
    return %arg0, %c0_i32 : i32, i32
  }
}

</mosaic_0001>

<llo_original>
// kernel: tpu_custom_call.1
$region0: #{tpu_custom_call.1}
  #allocation0 [shape = 'u32[]', space=smem, size = 0x4, offset = 0x4, fixed_abs, tag = 'smem constant byte address 0x4 - core index']
  #allocation1 [shape = 'u32[144,128]{1,0:T(1,128)}', space=vmem, size = 0x12000, scoped, tag = 'internal scratch']
  #allocation2 [shape = 's32[1]{0}', space=sflag, size = 0x4, scoped, tag = 'scoped memory for tpu_custom_call.1']
  #allocation3 [shape = 's32[1]{0:T(128)S(6)}', space=smem, size = 0x200, scoped, tag = 'prefetched SMEM operand 0']
  %s0 = inlined_call_operand.<no memory space> [shape: s32[1], index: 0, kind: input, shape index: {}]
  %s1 = inlined_call_operand.vmem [shape: f32[8,32], index: 1, kind: input, shape index: {}]
  %s2 = inlined_call_operand.vmem [shape: s32[8,1], index: 2, kind: input, shape index: {}]
  %s3 = inlined_call_operand.hbm [shape: f32[8,128], index: 3, kind: output, shape index: {}]
  %s4 = sld [smem:[#allocation0]]
  $region18: #{tpu_custom_call.1} parent=0
    _
  %s6 = ssub.s32 1, %s4
  %s7 = scalar_select 0, %s6, %s4
  %8 = sst [smem:[#allocation3]] %s0
  $region1: #{tpu_custom_call.1} parent=0
    #allocation4 [shape = 'u8[4096]{0}', space=vmem, size = 0x1000, scoped, tag = 'output window, operand 0, single buffered']
    #allocation5 [shape = 's32[1]{0}', space=sflag, size = 0x4, scoped, tag = 'scoped memory for tpu_custom_call.1']
    %9 = vsyncpa [#allocation5], 0
    // Predicated region
    $region2: #{tpu_custom_call.1} parent=1 // pred_check
      _
    $region3: #{tpu_custom_call.1} parent=1 // pred_check_branch
      %11 = sbr.rel (0) target = $region5
    $region4: #{tpu_custom_call.1} parent=1 // pred_region
      _
    $region5: #{tpu_custom_call.1} parent=1 // pred_fallthru
      _
    // Predicated region
    $region6: #{tpu_custom_call.1} parent=1 // pred_check
      _
    $region7: #{tpu_custom_call.1} parent=1 // pred_check_branch
      %13 = sbr.rel (0) target = $region9
    $region8: #{tpu_custom_call.1} parent=1 // pred_region
      _
    $region9: #{tpu_custom_call.1} parent=1 // pred_fallthru
      _
    %s14 = sld [smem:[#allocation3]]
    %v15 = vld [vmem:[%s1] sm:$0xff]
    %v16 = vld [vmem:[%s2] sm:$0xff]
    %v17 = vlaneseq
    %v18 = vand.u32 %v17, 127
    %19 = vset.pattern.permute.xlu0 0
    %20 = vperm.xlu0 %19, %v16
    %v21 = vpop.permute.xlu0 %20
    %vm22 = vcmp.eq.s32.totalorder %v18, %v21
    %v23 = vsel %vm22, 1, 0
    %v24 = vcvt.s32.f32 %v23
    %vm25 = vcmask 261120
    %v26 = vsel %vm25, %v15, -inf
    %27 = vmax.xlane.f32.xlu0 %v26
    %v28 = vpop.xlane.xlu0 %27
    %v29 = vsub.f32 %v15, %v28
    %v30 = vmul.f32 %v29, 1.442695
    %v31 = vpow.pop %v30
    %v32 = vsel %vm25, %v31, 0.0
    %33 = vadd.xlane.f32.xlu0 %v32
    %v34 = vpop.xlane.xlu0 %33
    %v35 = vmul.f32 %v29, %v24
    %v36 = vsel %vm25, %v35, 0.0
    %37 = vadd.xlane.f32.xlu0 %v36
    %v38 = vpop.xlane.xlu0 %37
    %v39 = vmul.f32 %v31, %v24
    %v40 = vsel %vm25, %v39, 0.0
    %41 = vadd.xlane.f32.xlu0 %v40
    %v42 = vpop.xlane.xlu0 %41
    %v43 = vlog2.pop %v34
    %v44 = vmul.f32 %v43, 0.6931472
    %v45 = vsub.f32 %v44, %v38
    %v46 = vrcp.pop %v34
    %v47 = vmul.f32 %v42, %v46
    %v48 = vsub.f32 1.0, %v47
    %v49 = vmax.f32 %v48, 0.0
    %v50 = vmul.f32 %v49, %v49
    %v51 = vmul.f32 %v50, %v45
    %s52 = smul.u32 0, 8
    %v53 = vlaneseq
    %v54 = vshrl.u32 %v53, 7
    %v55 = vstv %s52
    %v56 = vadd.s32 %v55, %v54
    %v57 = vstv %s14
    %vm58 = vcmp.lt.s32.totalorder %v56, %v57
    %v59 = vsel %vm58, %v51, 0.0
    %v60 = vrot.slane %v59, 4
    %v61 = vadd.f32 %v59, %v60
    %v62 = vrot.slane %v61, 2
    %v63 = vadd.f32 %v61, %v62
    %v64 = vrot.slane %v63, 1
    %v65 = vadd.f32 %v63, %v64
    %vm66 = vcmp.eq.s32.totalorder %v54, 0
    %vm67 = vcmp.eq.s32.totalorder %v18, 0
    %vm68 = vmand %vm66, %vm67
    %v69 = vsel %vm68, %v65, 0.0
    %70 = vst [vmem:[#allocation4] sm:$0xff] %v69
    // Predicated region
    $region10: #{tpu_custom_call.1} parent=1 // pred_check
      _
    $region11: #{tpu_custom_call.1} parent=1 // pred_check_branch
      %72 = sbr.rel (0) target = $region13
    $region12: #{tpu_custom_call.1} parent=1 // pred_region
      %s74 = ssub.s32 128, 128
      %75 = vsyncadd [#allocation5], %s74
      %s77 = sshll.u32 [#allocation4], 4
      %s78 = int_to_ptr.vmem [resolvable:$true] %s77
      %80 = dma.vmem_to_hbm [thread:$0]  %s78, 128, %s3, [#allocation5]
    $region13: #{tpu_custom_call.1} parent=1 // pred_fallthru
      _
    // Predicated region
    $region14: #{tpu_custom_call.1} parent=1 // pred_check
      _
    $region15: #{tpu_custom_call.1} parent=1 // pred_check_branch
      %82 = sbr.rel (0) target = $region17
    $region16: #{tpu_custom_call.1} parent=1 // pred_region
      %83 = dma.done [#allocation5], 128
    $region17: #{tpu_custom_call.1} parent=1 // pred_fallthru
      _
    %84 = vsyncpa [#allocation5], 1

</llo_original>
